<compile_context>
chip_gen: v6e
topology: v6e:2x2x1
jax: 0.10.0
libtpu: 0.0.40
codegen_flags: <defaults>
</compile_context>

<pallas_src>
import functools
import math

import jax
import jax.numpy as jnp
from jax.experimental import pallas as pl
from jax.experimental.pallas import tpu as pltpu


def _attention_e2n_kernel(qk_ref, qb_ref, e_ref, mi_ref, mj_ref, wv_ref, bv_ref,
                          out_ref, *, head_dim):
    qk = qk_ref[0]                     # (TI, De) f32   = (x@Wq + bq) @ Wk^T
    qb = qb_ref[0]                     # (TI, 1)  f32   = (x@Wq + bq) . bk
    ef = e_ref[0]                      # (TI, N, De)    native dtype (f32 / bf16)
    mi = mi_ref[0]                     # (TI, 1)  f32   row mask
    mj = mj_ref[0]                     # (1, N)   f32   column mask

    # --- scores: Att[i, j] = (<e[i,j,:], qk[i,:]> + qb[i]) / sqrt(H) ---------
    # VPU broadcast-multiply + lane reduce (no K materialisation, no MXU).
    att = jnp.sum(ef * qk[:, None, :], axis=-1) + qb              # (TI, N) f32
    att = att * jnp.float32(1.0 / math.sqrt(head_dim))

    # masked softmax over j — only the column mask matters here: masked columns
    # underflow to exactly 0 after exp; fully-masked rows are zeroed via `mi`.
    att = jnp.where(mj != 0.0, att, jnp.float32(-1.0e9))
    att = att - jnp.max(att, axis=1, keepdims=True)
    att = jnp.exp(att)
    att = att * pl.reciprocal(jnp.sum(att, axis=1, keepdims=True), approx=True)
    # TODO(synk): dropout — drop=0.0 (the module default) is the identity, so skipped.

    # --- output: (sum_j att[i,j] * e[i,j,:]) @ Wv + bv, then row-mask --------
    agg = jnp.sum(att[:, :, None] * ef, axis=1)                    # (TI, De) f32
    out = jnp.dot(agg, wv_ref[...], preferred_element_type=jnp.float32) + bv_ref[...]
    out_ref[0] = (out * mi).astype(out_ref.dtype)


def _round_up(v, m):
    return ((v + m - 1) // m) * m


def _vmem_capacity_bytes():
    try:
        info = pltpu.get_tpu_info()
        cap = getattr(info, "vmem_capacity_bytes", None)
        if cap:
            return int(cap)
    except Exception:
        pass
    return 64 * 1024 * 1024            # conservative (v7x-class) fallback


def _pick_row_tile(n_nodes, edge_dim, e_itemsize, budget_bytes, e_buffers):
    """Largest TI (multiple of 8 dividing N, or N itself) whose lane-padded
    per-step footprint (e pipeline buffers + two f32 slab-shaped elementwise
    temporaries) fits the VMEM budget."""
    de_pad = _round_up(edge_dim, 128)
    n_pad = _round_up(n_nodes, 8)
    per_row = n_pad * de_pad * (e_buffers * e_itemsize + 2 * 4)
    ti_cap = max(1, budget_bytes // max(per_row, 1))
    if ti_cap >= n_nodes:
        return n_nodes
    best = None
    t = 8
    while t <= min(ti_cap, n_nodes):
        if n_nodes % t == 0:
            best = t
        t += 8
    if best is not None:
        return best
    return 8 if n_nodes % 8 == 0 else n_nodes


def attention_edge_to_node_dense(x, e, node_mask, params, *, row_tile=None):
    B, N, Dn = x.shape
    De = e.shape[-1]
    H = params["wq"].shape[1]

    e_itemsize = jnp.dtype(e.dtype).itemsize
    vmem_cap = _vmem_capacity_bytes()
    big_vmem = vmem_cap >= 96 * 1024 * 1024            # v5e / v6e (128 MiB VMEM)
    e_buffers = 3 if big_vmem else 2                   # keep 2-deep on 64-MiB parts

    if row_tile is None:
        row_tile = _pick_row_tile(N, De, e_itemsize, vmem_cap // 3, e_buffers)
        # keep B * n_row_tiles even so v7x's two TensorCores stay balanced
        if ((B * (N // row_tile)) % 2 == 1 and row_tile % 16 == 0
                and N % (row_tile // 2) == 0):
            row_tile //= 2
    assert N % row_tile == 0 and (row_tile % 8 == 0 or row_tile == N)
    n_row_tiles = N // row_tile

    f32 = jnp.float32
    mi = node_mask.astype(f32)[:, :, None]                         # (B, N, 1)
    mj = node_mask.astype(f32)[:, None, :]                         # (B, 1, N)

    # O(N) query-side work hoisted out of the kernel; qk/qb fold the K
    # projection into the query:  <Q_i, e_ij@Wk + bk> = <e_ij, Q_i@Wk^T> + <Q_i, bk>
    # NOTE: the reference's `Q * x_mask` is a numerical no-op for the output
    # (masked rows are zeroed by `out * mi`) and is skipped.
    q = jnp.einsum("bnd,dh->bnh", x.astype(f32), params["wq"].astype(f32)) \
        + params["bq"].astype(f32)                                 # (B, N, H)
    qk = jnp.einsum("bnh,dh->bnd", q, params["wk"].astype(f32))    # (B, N, De)
    qb = jnp.einsum("bnh,h->bn", q, params["bk"].astype(f32))[..., None]   # (B, N, 1)

    wv = params["wv"].astype(f32)                                  # (De, H)
    bv = params["bv"].reshape(1, H).astype(f32)                    # (1, H)

    kernel = functools.partial(_attention_e2n_kernel, head_dim=H)

    # --- scoped-VMEM limit from 128-lane-padded footprints --------------------
    de_pad = _round_up(De, 128)
    h_pad = _round_up(H, 128)
    n_lane = _round_up(N, 128)
    n_sub = _round_up(N, 8)
    slab = row_tile * n_sub * de_pad
    est = (e_buffers * slab * e_itemsize                           # pipelined e blocks
           + 2 * slab * 4                                          # bcast-mul f32 temporaries
           + 2 * row_tile * (de_pad + h_pad + 2 * n_lane + 4 * 128) * 4  # qk/qb/att/agg/out
           + 4 * max(De, 8) * h_pad * 4)                           # Wv / bv (generous)
    limit_cap = (48 * 1024 * 1024) if vmem_cap <= 64 * 1024 * 1024 else (96 * 1024 * 1024)
    vmem_limit = int(min(max(int(1.25 * est), 32 * 1024 * 1024), limit_cap))

    def e_index_map(b, i):
        return (b, i, 0, 0)

    def make_e_spec(buffered):
        if buffered is None:
            return pl.BlockSpec((1, row_tile, N, De), e_index_map)
        return pl.BlockSpec((1, row_tile, N, De), e_index_map,
                            pipeline_mode=pl.Buffered(buffered))

    def run(e_spec):
        return pl.pallas_call(
            kernel,
            out_shape=jax.ShapeDtypeStruct((B, N, H), x.dtype),
            grid_spec=pltpu.PrefetchScalarGridSpec(
                num_scalar_prefetch=0,
                grid=(B, n_row_tiles),
                in_specs=[
                    pl.BlockSpec((1, row_tile, De), lambda b, i: (b, i, 0)),   # qk
                    pl.BlockSpec((1, row_tile, 1), lambda b, i: (b, i, 0)),    # qb
                    e_spec,                                                    # e (native dtype)
                    pl.BlockSpec((1, row_tile, 1), lambda b, i: (b, i, 0)),    # row mask
                    pl.BlockSpec((1, 1, N), lambda b, i: (b, 0, 0)),           # column mask
                    pl.BlockSpec((De, H), lambda b, i: (0, 0)),                # Wv
                    pl.BlockSpec((1, H), lambda b, i: (0, 0)),                 # bv
                ],
                out_specs=pl.BlockSpec((1, row_tile, H), lambda b, i: (b, i, 0)),
            ),
            compiler_params=pltpu.CompilerParams(
                dimension_semantics=("parallel", "parallel"),
                vmem_limit_bytes=vmem_limit),
        )(qk, qb, e, mi, mj, wv, bv)

    if e_buffers > 2:
        try:
            # deeper e pipeline on 128-MiB-VMEM parts (v5e/v6e)
            return run(make_e_spec(e_buffers)), e
        except Exception:
            pass                        # fall back to the default 2-deep pipeline
    return run(make_e_spec(None)), e


def _reference(x, e, node_mask, params):
    """Pure-JAX re-implementation of the PyTorch forward (for verification)."""
    m = node_mask.astype(jnp.float32)
    x_mask = m[:, :, None]                                 # (B, N, 1)
    e_mask_1 = x_mask[:, :, None, :]                       # (B, N, 1, 1)
    e_mask_2 = x_mask[:, None, :, :]                       # (B, 1, N, 1)
    H = params["wq"].shape[1]

    Q = (jnp.einsum("bnd,dh->bnh", x, params["wq"]) + params["bq"]) * x_mask
    K = (jnp.einsum("bijd,dh->bijh", e.astype(jnp.float32), params["wk"])
         + params["bk"]) * e_mask_1 * e_mask_2
    V = (jnp.einsum("bijd,dh->bijh", e.astype(jnp.float32), params["wv"])
         + params["bv"]) * e_mask_1 * e_mask_2

    att = (Q[:, :, None, :] * K).sum(axis=3) / jnp.sqrt(jnp.float32(H))
    att_mask = (m[:, None, :] * m[:, :, None]) != 0
    att = jnp.where(att_mask, att, jnp.float32(-1.0e9))
    att = jax.nn.softmax(att, axis=2)
    out = (att[..., None] * V * e_mask_1 * e_mask_2).sum(axis=2)
    return out, e


if __name__ == "__main__":
    B, N, HIDDEN, HEAD = 2, 16, 32, 32   # shrink_node_dim=False, shrink_edge_dim=False

    key = jax.random.PRNGKey(0)
    kx, ke, kwq, kbq, kwk, kbk, kwv, kbv = jax.random.split(key, 8)

    x = jax.random.normal(kx, (B, N, HIDDEN), dtype=jnp.float32)
    e = jax.random.normal(ke, (B, N, N, HIDDEN), dtype=jnp.float32)

    # node mask: batch 0 fully valid, batch 1 has the last 5 nodes padded out
    node_mask = jnp.ones((B, N), dtype=jnp.float32)
    node_mask = node_mask.at[1, N - 5:].set(0.0)

    # deterministic linear parameters (stored as (in_dim, out_dim))
    s_in = 1.0 / math.sqrt(HIDDEN)
    params = {
        "wq": jax.random.uniform(kwq, (HIDDEN, HEAD), jnp.float32, -s_in, s_in),
        "bq": jax.random.uniform(kbq, (HEAD,), jnp.float32, -s_in, s_in),
        "wk": jax.random.uniform(kwk, (HIDDEN, HEAD), jnp.float32, -s_in, s_in),
        "bk": jax.random.uniform(kbk, (HEAD,), jnp.float32, -s_in, s_in),
        "wv": jax.random.uniform(kwv, (HIDDEN, HEAD), jnp.float32, -s_in, s_in),
        "bv": jax.random.uniform(kbv, (HEAD,), jnp.float32, -s_in, s_in),
    }

    ref_x, ref_e = _reference(x, e, node_mask, params)

    # explicit small row tile
    out_x, out_e = attention_edge_to_node_dense(x, e, node_mask, params, row_tile=8)
    out_x = jax.block_until_ready(out_x)
    out_e = jax.block_until_ready(out_e)
    assert out_x.shape == (B, N, HEAD)
    assert out_e.shape == e.shape
    assert jnp.allclose(out_x, ref_x, rtol=1e-2, atol=1e-2), "f32 (row_tile=8) mismatch"
    assert jnp.array_equal(out_e, e)

    # auto (generation-aware) tiling
    out_x2, _ = attention_edge_to_node_dense(x, e, node_mask, params)
    out_x2 = jax.block_until_ready(out_x2)
    assert jnp.allclose(out_x2, ref_x, rtol=1e-2, atol=1e-2), "f32 (auto tile) mismatch"

    # e stored in bf16 upstream — kernel streams it natively (halves HBM traffic)
    out_xb, _ = attention_edge_to_node_dense(x, e.astype(jnp.bfloat16), node_mask, params)
    out_xb = jax.block_until_ready(out_xb)
    assert jnp.allclose(out_xb, ref_x, rtol=4e-2, atol=4e-2), "bf16-e path mismatch"

    print("KERNEL_OK")
</pallas_src>

<mosaic_0001>
module attributes {stable_mosaic.version = 11 : i64} {
  func.func @_attention_e2n_kernel(%arg0: i32, %arg1: i32, %arg2: memref<1x8x32xf32, #tpu.memory_space<vmem>>, %arg3: memref<1x8x1xf32, #tpu.memory_space<vmem>>, %arg4: memref<1x8x16x32xf32, #tpu.memory_space<vmem>>, %arg5: memref<1x8x1xf32, #tpu.memory_space<vmem>>, %arg6: memref<1x1x16xf32, #tpu.memory_space<vmem>>, %arg7: memref<32x32xf32, #tpu.memory_space<vmem>>, %arg8: memref<1x32xf32, #tpu.memory_space<vmem>>, %arg9: memref<1x8x32xf32, #tpu.memory_space<vmem>>) attributes {dimension_semantics = [#tpu.dimension_semantics<parallel>, #tpu.dimension_semantics<parallel>], iteration_bounds = array<i64: 2, 2>, scalar_prefetch = 0 : i64, scratch_operands = 0 : i64, tpu.core_type = #tpu.core_type<tc>, window_params = [{transform_indices = @transform_0, window_bounds = array<i64: 1, 8, 32>}, {transform_indices = @transform_1, window_bounds = array<i64: 1, 8, 1>}, {transform_indices = @transform_2, window_bounds = array<i64: 1, 8, 16, 32>}, {transform_indices = @transform_3, window_bounds = array<i64: 1, 8, 1>}, {transform_indices = @transform_4, window_bounds = array<i64: 1, 1, 16>}, {pipeline_mode = #tpu.pipeline_mode<synchronous>, transform_indices = @transform_5, window_bounds = array<i64: 32, 32>}, {pipeline_mode = #tpu.pipeline_mode<synchronous>, transform_indices = @transform_6, window_bounds = array<i64: 1, 32>}, {transform_indices = @transform_7, window_bounds = array<i64: 1, 8, 32>}]} {
    %c0 = arith.constant 0 : index
    %c0_0 = arith.constant 0 : index
    %c0_1 = arith.constant 0 : index
    %0 = vector.load %arg2[%c0, %c0_0, %c0_1] : memref<1x8x32xf32, #tpu.memory_space<vmem>>, vector<1x8x32xf32>
    %1 = vector.shape_cast %0 : vector<1x8x32xf32> to vector<8x32xf32>
    %c0_2 = arith.constant 0 : index
    %c0_3 = arith.constant 0 : index
    %c0_4 = arith.constant 0 : index
    %2 = vector.load %arg3[%c0_2, %c0_3, %c0_4] : memref<1x8x1xf32, #tpu.memory_space<vmem>>, vector<1x8x1xf32>
    %3 = vector.shape_cast %2 : vector<1x8x1xf32> to vector<8x1xf32>
    %c0_5 = arith.constant 0 : index
    %c0_6 = arith.constant 0 : index
    %c0_7 = arith.constant 0 : index
    %c0_8 = arith.constant 0 : index
    %4 = vector.load %arg4[%c0_5, %c0_6, %c0_7, %c0_8] : memref<1x8x16x32xf32, #tpu.memory_space<vmem>>, vector<1x8x16x32xf32>
    %5 = vector.shape_cast %4 : vector<1x8x16x32xf32> to vector<8x16x32xf32>
    %c0_9 = arith.constant 0 : index
    %c0_10 = arith.constant 0 : index
    %c0_11 = arith.constant 0 : index
    %6 = vector.load %arg5[%c0_9, %c0_10, %c0_11] : memref<1x8x1xf32, #tpu.memory_space<vmem>>, vector<1x8x1xf32>
    %7 = vector.shape_cast %6 : vector<1x8x1xf32> to vector<8x1xf32>
    %c0_12 = arith.constant 0 : index
    %c0_13 = arith.constant 0 : index
    %c0_14 = arith.constant 0 : index
    %8 = vector.load %arg6[%c0_12, %c0_13, %c0_14] : memref<1x1x16xf32, #tpu.memory_space<vmem>>, vector<1x1x16xf32>
    %9 = vector.shape_cast %8 : vector<1x1x16xf32> to vector<1x16xf32>
    %10 = vector.shape_cast %1 : vector<8x32xf32> to vector<8x1x32xf32>
    %11 = vector.broadcast %10 : vector<8x1x32xf32> to vector<8x16x32xf32>
    %12 = arith.mulf %5, %11 : vector<8x16x32xf32>
    %cst = arith.constant dense<0.000000e+00> : vector<8x16xf32>
    %13 = vector.multi_reduction <add>, %12, %cst [2] : vector<8x16x32xf32> to vector<8x16xf32>
    %14 = vector.broadcast %3 : vector<8x1xf32> to vector<8x16xf32>
    %15 = arith.addf %13, %14 : vector<8x16xf32>
    %cst_15 = arith.constant 0.176776692 : f32
    %16 = vector.broadcast %cst_15 : f32 to vector<8x16xf32>
    %17 = arith.mulf %15, %16 : vector<8x16xf32>
    %cst_16 = arith.constant 0.000000e+00 : f32
    %18 = vector.broadcast %cst_16 : f32 to vector<1x16xf32>
    %19 = arith.cmpf one, %9, %18 : vector<1x16xf32>
    %cst_17 = arith.constant -1.000000e+09 : f32
    %20 = vector.shape_cast %19 : vector<1x16xi1> to vector<1x16xi1>
    %21 = vector.broadcast %20 : vector<1x16xi1> to vector<8x16xi1>
    %22 = vector.broadcast %cst_17 : f32 to vector<8x16xf32>
    %23 = arith.select %21, %17, %22 : vector<8x16xi1>, vector<8x16xf32>
    %cst_18 = arith.constant dense<0xFF800000> : vector<8xf32>
    %24 = vector.multi_reduction <maximumf>, %23, %cst_18 [1] : vector<8x16xf32> to vector<8xf32>
    %25 = vector.shape_cast %24 : vector<8xf32> to vector<8x1xf32>
    %26 = vector.broadcast %25 : vector<8x1xf32> to vector<8x16xf32>
    %27 = arith.subf %23, %26 : vector<8x16xf32>
    %28 = math.exp %27 : vector<8x16xf32>
    %cst_19 = arith.constant dense<0.000000e+00> : vector<8xf32>
    %29 = vector.multi_reduction <add>, %28, %cst_19 [1] : vector<8x16xf32> to vector<8xf32>
    %30 = vector.shape_cast %29 : vector<8xf32> to vector<8x1xf32>
    %31 = tpu.reciprocal %30 {approx = true} : vector<8x1xf32> -> vector<8x1xf32>
    %32 = vector.broadcast %31 : vector<8x1xf32> to vector<8x16xf32>
    %33 = arith.mulf %28, %32 : vector<8x16xf32>
    %34 = vector.shape_cast %33 : vector<8x16xf32> to vector<8x16x1xf32>
    %35 = vector.broadcast %34 : vector<8x16x1xf32> to vector<8x16x32xf32>
    %36 = arith.mulf %35, %5 : vector<8x16x32xf32>
    %cst_20 = arith.constant dense<0.000000e+00> : vector<8x32xf32>
    %37 = vector.multi_reduction <add>, %36, %cst_20 [1] : vector<8x16x32xf32> to vector<8x32xf32>
    %c0_21 = arith.constant 0 : index
    %c0_22 = arith.constant 0 : index
    %38 = vector.load %arg7[%c0_21, %c0_22] : memref<32x32xf32, #tpu.memory_space<vmem>>, vector<32x32xf32>
    %cst_23 = arith.constant dense<0.000000e+00> : vector<8x32xf32>
    %39 = tpu.matmul %37, %38, %cst_23 {dimension_numbers = #tpu.dot_dimension_numbers<[1], [0], [0], [1], [0, 0, 1, 1], [], []>} : vector<8x32xf32>, vector<32x32xf32>, vector<8x32xf32> -> vector<8x32xf32>
    %c0_24 = arith.constant 0 : index
    %c0_25 = arith.constant 0 : index
    %40 = vector.load %arg8[%c0_24, %c0_25] : memref<1x32xf32, #tpu.memory_space<vmem>>, vector<1x32xf32>
    %41 = vector.broadcast %40 : vector<1x32xf32> to vector<8x32xf32>
    %42 = arith.addf %39, %41 : vector<8x32xf32>
    %43 = vector.broadcast %7 : vector<8x1xf32> to vector<8x32xf32>
    %44 = arith.mulf %42, %43 : vector<8x32xf32>
    %c0_26 = arith.constant 0 : index
    %c0_27 = arith.constant 0 : index
    %c0_28 = arith.constant 0 : index
    %45 = vector.load %arg9[%c0_26, %c0_27, %c0_28] : memref<1x8x32xf32, #tpu.memory_space<vmem>>, vector<1x8x32xf32>
    %46 = vector.shape_cast %45 : vector<1x8x32xf32> to vector<8x32xf32>
    %47 = vector.shape_cast %44 : vector<8x32xf32> to vector<1x8x32xf32>
    tpu.vector_store %arg9[%c0_26, %c0_27, %c0_28], %47 {strides = array<i32>} : memref<1x8x32xf32, #tpu.memory_space<vmem>>, vector<1x8x32xf32>,
    return
  }
  func.func @transform_0(%arg0: i32, %arg1: i32) -> (i32, i32, i32) {
    %c0_i32 = arith.constant 0 : i32
    %c0_i32_0 = arith.constant 0 : i32
    return %arg0, %arg1, %c0_i32 : i32, i32, i32
  }
  func.func @transform_1(%arg0: i32, %arg1: i32) -> (i32, i32, i32) {
    %c0_i32 = arith.constant 0 : i32
    %c0_i32_0 = arith.constant 0 : i32
    return %arg0, %arg1, %c0_i32 : i32, i32, i32
  }
  func.func @transform_2(%arg0: i32, %arg1: i32) -> (i32, i32, i32, i32) {
    %c0_i32 = arith.constant 0 : i32
    %c0_i32_0 = arith.constant 0 : i32
    %c0_i32_1 = arith.constant 0 : i32
    return %arg0, %arg1, %c0_i32, %c0_i32_0 : i32, i32, i32, i32
  }
  func.func @transform_3(%arg0: i32, %arg1: i32) -> (i32, i32, i32) {
    %c0_i32 = arith.constant 0 : i32
    %c0_i32_0 = arith.constant 0 : i32
    return %arg0, %arg1, %c0_i32 : i32, i32, i32
  }
  func.func @transform_4(%arg0: i32, %arg1: i32) -> (i32, i32, i32) {
    %c0_i32 = arith.constant 0 : i32
    %c0_i32_0 = arith.constant 0 : i32
    %c0_i32_1 = arith.constant 0 : i32
    return %arg0, %c0_i32, %c0_i32_0 : i32, i32, i32
  }
  func.func @transform_5(%arg0: i32, %arg1: i32) -> (i32, i32) {
    %c0_i32 = arith.constant 0 : i32
    %c0_i32_0 = arith.constant 0 : i32
    %c0_i32_1 = arith.constant 0 : i32
    return %c0_i32, %c0_i32_0 : i32, i32
  }
  func.func @transform_6(%arg0: i32, %arg1: i32) -> (i32, i32) {
    %c0_i32 = arith.constant 0 : i32
    %c0_i32_0 = arith.constant 0 : i32
    %c0_i32_1 = arith.constant 0 : i32
    return %c0_i32, %c0_i32_0 : i32, i32
  }
  func.func @transform_7(%arg0: i32, %arg1: i32) -> (i32, i32, i32) {
    %c0_i32 = arith.constant 0 : i32
    %c0_i32_0 = arith.constant 0 : i32
    return %arg0, %arg1, %c0_i32 : i32, i32, i32
  }
}

</mosaic_0001>

<llo_original>
// kernel: tpu_custom_call.1
$region0: #{tpu_custom_call.1}
  #allocation0 [shape = 'u32[]', space=smem, size = 0x4, offset = 0x4, fixed_abs, tag = 'smem constant byte address 0x4 - core index']
  #allocation1 [shape = 'u32[144,128]{1,0:T(1,128)}', space=vmem, size = 0x12000, scoped, tag = 'internal scratch']
  %s0 = inlined_call_operand.vmem [shape: f32[2,16,32], index: 0, kind: input, shape index: {}]
  %s1 = inlined_call_operand.vmem [shape: f32[2,16,1], index: 1, kind: input, shape index: {}]
  %s2 = inlined_call_operand.hbm [shape: f32[2,16,16,32], index: 2, kind: input, shape index: {}]
  %s3 = inlined_call_operand.vmem [shape: f32[2,16,1], index: 3, kind: input, shape index: {}]
  %s4 = inlined_call_operand.vmem [shape: f32[2,1,16], index: 4, kind: input, shape index: {}]
  %s5 = inlined_call_operand.vmem [shape: f32[32,32], index: 5, kind: input, shape index: {}]
  %s6 = inlined_call_operand.vmem [shape: f32[1,32], index: 6, kind: input, shape index: {}]
  %s7 = inlined_call_operand.hbm [shape: f32[2,16,32], index: 7, kind: output, shape index: {}]
  %s8 = sld [smem:[#allocation0]]
  $region65: #{tpu_custom_call.1} parent=0
    _
  %s10 = ssub.s32 1, %s8
  %s11 = scalar_select 0, %s10, %s8
  $region1: #{tpu_custom_call.1} parent=0
    #allocation2 [shape = 'u8[131072]{0}', space=vmem, size = 0x20000, scoped, tag = 'input window, operand 2']
    #allocation3 [shape = 's32[2]{0}', space=sflag, size = 0x8, scoped, tag = 'scoped memory for tpu_custom_call.1']
    #allocation4 [shape = 's32[2]{0}', space=sflag, size = 0x8, scoped, tag = 'scoped memory for tpu_custom_call.1']
    #allocation5 [shape = 'u8[8192]{0}', space=vmem, size = 0x2000, scoped, tag = 'output window, operand 0']
    %12 = vsyncpa [#allocation3], 0
    %s13 = scalar_lea.sflag [#allocation3], 1
    %14 = vsyncpa %s13, 0
    %15 = vsyncpa [#allocation4], 0
    %s16 = scalar_lea.sflag [#allocation4], 1
    %17 = vsyncpa %s16, 0
    loop: start=0, step=1, limit=6
    $region2: #{tpu_custom_call.1} parent=1 // loop_pre_header
      _
    $region3: #{tpu_custom_call.1} parent=1 // loop_header
      %s19 = sphi 0, %s23
      %p20 = scmp.ge.s32.totalorder %s19, 6
      %s26 = sphi 0, %s38
      %s27 = sphi 0, %s34
      %s28 = sphi 0, %s26
      %s29 = sphi 0, %s27
      %s30 = sphi 0, %s28
      %s31 = sphi 0, %s29
      %s43 = sphi 0, %s45
      %s46 = sphi 0, %s43
      %s47 = sphi 0, %s46
      %s63 = sphi 0, %s47
      %s71 = sphi 0, %s73
      %s74 = sphi 0, %s71
      %s75 = sphi 0, %s74
      %s91 = sphi 0, %s75
      %s99 = sphi 0, %s101
      %s102 = sphi 0, %s99
      %s103 = sphi 0, %s102
      %s119 = sphi 0, %s103
      %s127 = sphi 0, %s129
      %s130 = sphi 0, %s127
      %s131 = sphi 0, %s130
      %s147 = sphi 0, %s131
      %s153 = sphi 0, %s155
      %s156 = sphi 0, %s153
      %s157 = sphi 0, %s156
      %s173 = sphi 0, %s157
      %s177 = sphi 0, %s177
      %s179 = sphi 0, %s177
      %s180 = sphi 0, %s179
      %s194 = sphi 0, %s180
      %s198 = sphi 0, %s198
      %s200 = sphi 0, %s198
      %s201 = sphi 0, %s200
      %s215 = sphi 0, %s201
      %s223 = sphi 0, %s225
      %s226 = sphi 0, %s223
      %s227 = sphi 0, %s226
      %s243 = sphi 0, %s227
    $region4: #{tpu_custom_call.1} parent=1 // loop_header_branch
      %22 = sbr.rel (%p20) target = $region8
    $region5: #{tpu_custom_call.1} parent=1 // loop_body
      %s24 = ssub.s32 %s19, 1
      %s25 = ssub.s32 %s19, 2
      %s32 = sadd.s32 1, %s27
      %p33 = scmp.ge.s32.totalorder %s32, 2
      %s34 = scalar_select %p33, 0, %s32
      %s35 = sadd.s32 1, %s26
      %s36 = scalar_select %p33, %s35, %s26
      %p37 = scmp.ge.s32.totalorder %s36, 2
      %s38 = scalar_select %p37, 0, %s36
      %s39 = ssub.s32 %s26, %s38
      %s40 = ssub.s32 %s27, %s34
      %s41 = sor.u32 %s39, %s40
      %p42 = scmp.eq.s32.totalorder %s41, 0
      %s44 = sadd.s32 %s43, 1
      %s45 = scalar_select %p42, %s43, %s44
      %p48 = pneg %p42
      %p49 = scmp.eq.s32.totalorder %s19, 3
      %p50 = por %p48, %p49
      %p51 = scmp.ne.s32.totalorder %s43, %s46
      %p52 = scmp.eq.s32.totalorder %s19, 0
      %p53 = por %p51, %p52
      %p54 = scmp.ne.s32.totalorder %s43, %s46
      %p55 = scmp.eq.s32.totalorder %s24, 3
      %p56 = por %p54, %p55
      %p57 = scmp.ne.s32.totalorder %s46, %s47
      %p58 = scmp.eq.s32.totalorder %s24, 0
      %p59 = por %p57, %p58
      %p60 = scmp.ne.s32.totalorder %s46, %s47
      %p61 = scmp.eq.s32.totalorder %s25, 3
      %p62 = por %p60, %p61
      %p64 = scmp.ne.s32.totalorder %s47, %s63
      %p65 = scmp.eq.s32.totalorder %s25, 0
      %p66 = por %p64, %p65
      %s67 = ssub.s32 %s26, %s38
      %s68 = ssub.s32 %s27, %s34
      %s69 = sor.u32 %s67, %s68
      %p70 = scmp.eq.s32.totalorder %s69, 0
      %s72 = sadd.s32 %s71, 1
      %s73 = scalar_select %p70, %s71, %s72
      %p76 = pneg %p70
      %p77 = scmp.eq.s32.totalorder %s19, 3
      %p78 = por %p76, %p77
      %p79 = scmp.ne.s32.totalorder %s71, %s74
      %p80 = scmp.eq.s32.totalorder %s19, 0
      %p81 = por %p79, %p80
      %p82 = scmp.ne.s32.totalorder %s71, %s74
      %p83 = scmp.eq.s32.totalorder %s24, 3
      %p84 = por %p82, %p83
      %p85 = scmp.ne.s32.totalorder %s74, %s75
      %p86 = scmp.eq.s32.totalorder %s24, 0
      %p87 = por %p85, %p86
      %p88 = scmp.ne.s32.totalorder %s74, %s75
      %p89 = scmp.eq.s32.totalorder %s25, 3
      %p90 = por %p88, %p89
      %p92 = scmp.ne.s32.totalorder %s75, %s91
      %p93 = scmp.eq.s32.totalorder %s25, 0
      %p94 = por %p92, %p93
      %s95 = ssub.s32 %s26, %s38
      %s96 = ssub.s32 %s27, %s34
      %s97 = sor.u32 %s95, %s96
      %p98 = scmp.eq.s32.totalorder %s97, 0
      %s100 = sadd.s32 %s99, 1
      %s101 = scalar_select %p98, %s99, %s100
      %p104 = pneg %p98
      %p105 = scmp.eq.s32.totalorder %s19, 3
      %p106 = por %p104, %p105
      %p107 = scmp.ne.s32.totalorder %s99, %s102
      %p108 = scmp.eq.s32.totalorder %s19, 0
      %p109 = por %p107, %p108
      %p110 = scmp.ne.s32.totalorder %s99, %s102
      %p111 = scmp.eq.s32.totalorder %s24, 3
      %p112 = por %p110, %p111
      %p113 = scmp.ne.s32.totalorder %s102, %s103
      %p114 = scmp.eq.s32.totalorder %s24, 0
      %p115 = por %p113, %p114
      %p116 = scmp.ne.s32.totalorder %s102, %s103
      %p117 = scmp.eq.s32.totalorder %s25, 3
      %p118 = por %p116, %p117
      %p120 = scmp.ne.s32.totalorder %s103, %s119
      %p121 = scmp.eq.s32.totalorder %s25, 0
      %p122 = por %p120, %p121
      %s123 = ssub.s32 %s26, %s38
      %s124 = ssub.s32 %s27, %s34
      %s125 = sor.u32 %s123, %s124
      %p126 = scmp.eq.s32.totalorder %s125, 0
      %s128 = sadd.s32 %s127, 1
      %s129 = scalar_select %p126, %s127, %s128
      %p132 = pneg %p126
      %p133 = scmp.eq.s32.totalorder %s19, 3
      %p134 = por %p132, %p133
      %p135 = scmp.ne.s32.totalorder %s127, %s130
      %p136 = scmp.eq.s32.totalorder %s19, 0
      %p137 = por %p135, %p136
      %p138 = scmp.ne.s32.totalorder %s127, %s130
      %p139 = scmp.eq.s32.totalorder %s24, 3
      %p140 = por %p138, %p139
      %p141 = scmp.ne.s32.totalorder %s130, %s131
      %p142 = scmp.eq.s32.totalorder %s24, 0
      %p143 = por %p141, %p142
      %p144 = scmp.ne.s32.totalorder %s130, %s131
      %p145 = scmp.eq.s32.totalorder %s25, 3
      %p146 = por %p144, %p145
      %p148 = scmp.ne.s32.totalorder %s131, %s147
      %p149 = scmp.eq.s32.totalorder %s25, 0
      %p150 = por %p148, %p149
      %s151 = ssub.s32 %s26, %s38
      %p152 = scmp.eq.s32.totalorder %s151, 0
      %s154 = sadd.s32 %s153, 1
      %s155 = scalar_select %p152, %s153, %s154
      %p158 = pneg %p152
      %p159 = scmp.eq.s32.totalorder %s19, 3
      %p160 = por %p158, %p159
      %p161 = scmp.ne.s32.totalorder %s153, %s156
      %p162 = scmp.eq.s32.totalorder %s19, 0
      %p163 = por %p161, %p162
      %p164 = scmp.ne.s32.totalorder %s153, %s156
      %p165 = scmp.eq.s32.totalorder %s24, 3
      %p166 = por %p164, %p165
      %p167 = scmp.ne.s32.totalorder %s156, %s157
      %p168 = scmp.eq.s32.totalorder %s24, 0
      %p169 = por %p167, %p168
      %p170 = scmp.ne.s32.totalorder %s156, %s157
      %p171 = scmp.eq.s32.totalorder %s25, 3
      %p172 = por %p170, %p171
      %p174 = scmp.ne.s32.totalorder %s157, %s173
      %p175 = scmp.eq.s32.totalorder %s25, 0
      %p176 = por %p174, %p175
      %s178 = sadd.s32 %s177, 1
      %p181 = scmp.eq.s32.totalorder %s19, 3
      %p182 = scmp.ne.s32.totalorder %s177, %s179
      %p183 = scmp.eq.s32.totalorder %s19, 0
      %p184 = por %p182, %p183
      %p185 = scmp.ne.s32.totalorder %s177, %s179
      %p186 = scmp.eq.s32.totalorder %s24, 3
      %p187 = por %p185, %p186
      %p188 = scmp.ne.s32.totalorder %s179, %s180
      %p189 = scmp.eq.s32.totalorder %s24, 0
      %p190 = por %p188, %p189
      %p191 = scmp.ne.s32.totalorder %s179, %s180
      %p192 = scmp.eq.s32.totalorder %s25, 3
      %p193 = por %p191, %p192
      %p195 = scmp.ne.s32.totalorder %s180, %s194
      %p196 = scmp.eq.s32.totalorder %s25, 0
      %p197 = por %p195, %p196
      %s199 = sadd.s32 %s198, 1
      %p202 = scmp.eq.s32.totalorder %s19, 3
      %p203 = scmp.ne.s32.totalorder %s198, %s200
      %p204 = scmp.eq.s32.totalorder %s19, 0
      %p205 = por %p203, %p204
      %p206 = scmp.ne.s32.totalorder %s198, %s200
      %p207 = scmp.eq.s32.totalorder %s24, 3
      %p208 = por %p206, %p207
      %p209 = scmp.ne.s32.totalorder %s200, %s201
      %p210 = scmp.eq.s32.totalorder %s24, 0
      %p211 = por %p209, %p210
      %p212 = scmp.ne.s32.totalorder %s200, %s201
      %p213 = scmp.eq.s32.totalorder %s25, 3
      %p214 = por %p212, %p213
      %p216 = scmp.ne.s32.totalorder %s201, %s215
      %p217 = scmp.eq.s32.totalorder %s25, 0
      %p218 = por %p216, %p217
      %s219 = ssub.s32 %s26, %s38
      %s220 = ssub.s32 %s27, %s34
      %s221 = sor.u32 %s219, %s220
      %p222 = scmp.eq.s32.totalorder %s221, 0
      %s224 = sadd.s32 %s223, 1
      %s225 = scalar_select %p222, %s223, %s224
      %p228 = pneg %p222
      %p229 = scmp.eq.s32.totalorder %s19, 3
      %p230 = por %p228, %p229
      %p231 = scmp.ne.s32.totalorder %s223, %s226
      %p232 = scmp.eq.s32.totalorder %s19, 0
      %p233 = por %p231, %p232
      %p234 = scmp.ne.s32.totalorder %s223, %s226
      %p235 = scmp.eq.s32.totalorder %s24, 3
      %p236 = por %p234, %p235
      %p237 = scmp.ne.s32.totalorder %s226, %s227
      %p238 = scmp.eq.s32.totalorder %s24, 0
      %p239 = por %p237, %p238
      %p240 = scmp.ne.s32.totalorder %s226, %s227
      %p241 = scmp.eq.s32.totalorder %s25, 3
      %p242 = por %p240, %p241
      %p244 = scmp.ne.s32.totalorder %s227, %s243
      %p245 = scmp.eq.s32.totalorder %s25, 0
      %p246 = por %p244, %p245
      %p247 = scmp.le.s32.totalorder 1, %s19
      %p248 = scmp.lt.s32.totalorder %s19, 5
      %p249 = pnand %p247, %p248
      %p250 = pneg %p249
      // Predicated region
      $region9: #{tpu_custom_call.1} parent=5 // pred_check
        _
      $region10: #{tpu_custom_call.1} parent=5 // pred_check_branch
        %252 = sbr.rel (%p249) target = $region12
      $region11: #{tpu_custom_call.1} parent=5 // pred_region
        %s253 = ssub.s32 %s19, 1
        // Predicated region
        $region13: #{tpu_custom_call.1} parent=11 // pred_check
          %p254 = pneg %p190
        $region14: #{tpu_custom_call.1} parent=11 // pred_check_branch
          %256 = sbr.rel (%p254) target = $region16
        $region15: #{tpu_custom_call.1} parent=11 // pred_region
          _
        $region16: #{tpu_custom_call.1} parent=11 // pred_fallthru
          _
        // Predicated region
        $region17: #{tpu_custom_call.1} parent=11 // pred_check
          %p257 = pneg %p211
        $region18: #{tpu_custom_call.1} parent=11 // pred_check_branch
          %259 = sbr.rel (%p257) target = $region20
        $region19: #{tpu_custom_call.1} parent=11 // pred_region
          _
        $region20: #{tpu_custom_call.1} parent=11 // pred_fallthru
          _
      $region12: #{tpu_custom_call.1} parent=5 // pred_fallthru
        _
      %p260 = scmp.lt.s32.totalorder %s19, 4
      // Predicated region
      $region21: #{tpu_custom_call.1} parent=5 // pred_check
        %p261 = pneg %p260
      $region22: #{tpu_custom_call.1} parent=5 // pred_check_branch
        %263 = sbr.rel (%p261) target = $region24
      $region23: #{tpu_custom_call.1} parent=5 // pred_region
        // Predicated region
        $region25: #{tpu_custom_call.1} parent=23 // pred_check
          %p264 = pneg %p53
        $region26: #{tpu_custom_call.1} parent=23 // pred_check_branch
          %266 = sbr.rel (%p264) target = $region28
        $region27: #{tpu_custom_call.1} parent=23 // pred_region
          %p267 = scmp.lt.s32.totalorder %s26, 1
          %s268 = scalar_select %p267, %s26, 1
          %p269 = scmp.lt.s32.totalorder %s27, 1
          %s270 = scalar_select %p269, %s27, 1
          %s271 = smul.addr %s268, 2
          %s272 = sadd.s32 %s270, %s271
          %s273 = smul.addr %s272, 8
          %s274 = scalar_lea.vmem %s0, %s273
        $region28: #{tpu_custom_call.1} parent=23 // pred_fallthru
          _
        // Predicated region
        $region29: #{tpu_custom_call.1} parent=23 // pred_check
          %p275 = pneg %p81
        $region30: #{tpu_custom_call.1} parent=23 // pred_check_branch
          %277 = sbr.rel (%p275) target = $region32
        $region31: #{tpu_custom_call.1} parent=23 // pred_region
          %p278 = scmp.lt.s32.totalorder %s26, 1
          %s279 = scalar_select %p278, %s26, 1
          %p280 = scmp.lt.s32.totalorder %s27, 1
          %s281 = scalar_select %p280, %s27, 1
          %s282 = smul.addr %s279, 2
          %s283 = sadd.s32 %s281, %s282
          %s284 = smul.addr %s283, 8
          %s285 = scalar_lea.vmem %s1, %s284
        $region32: #{tpu_custom_call.1} parent=23 // pred_fallthru
          _
        // Predicated region
        $region33: #{tpu_custom_call.1} parent=23 // pred_check
          %p286 = pneg %p109
        $region34: #{tpu_custom_call.1} parent=23 // pred_check_branch
          %288 = sbr.rel (%p286) target = $region36
        $region35: #{tpu_custom_call.1} parent=23 // pred_region
          %s289 = sand.u32 %s99, 1
          %s290 = scalar_lea.sflag [#allocation3], %s289
          %s291 = sand.u32 %s99, 1
          %s292 = smul.addr %s291, 128
          %s293 = scalar_lea.vmem [#allocation2], %s292
          %s294 = smul.u32 8, %s27
          %s296 = ssub.s32 2048, 2048
          %297 = vsyncadd %s290, %s296
          %s298 = smul.addr %s294, 2
          %s299 = smul.addr %s26, 32
          %s300 = sadd.s32 %s298, %s299
          %s301 = smul.addr %s300, 128
          %s302 = scalar_lea.hbm %s2, %s301
          %s303 = sshll.u32 %s293, 4
          %s304 = int_to_ptr.vmem [resolvable:$true] %s303
          %309 = dma.hbm_to_vmem [thread:$0]  %s302, 2048, %s304, %s290, 128, 128, 8
        $region36: #{tpu_custom_call.1} parent=23 // pred_fallthru
          _
        // Predicated region
        $region37: #{tpu_custom_call.1} parent=23 // pred_check
          %p310 = pneg %p137
        $region38: #{tpu_custom_call.1} parent=23 // pred_check_branch
          %312 = sbr.rel (%p310) target = $region40
        $region39: #{tpu_custom_call.1} parent=23 // pred_region
          %p313 = scmp.lt.s32.totalorder %s26, 1
          %s314 = scalar_select %p313, %s26, 1
          %p315 = scmp.lt.s32.totalorder %s27, 1
          %s316 = scalar_select %p315, %s27, 1
          %s317 = smul.addr %s314, 2
          %s318 = sadd.s32 %s316, %s317
          %s319 = smul.addr %s318, 8
          %s320 = scalar_lea.vmem %s3, %s319
        $region40: #{tpu_custom_call.1} parent=23 // pred_fallthru
          _
        // Predicated region
        $region41: #{tpu_custom_call.1} parent=23 // pred_check
          %p321 = pneg %p163
        $region42: #{tpu_custom_call.1} parent=23 // pred_check_branch
          %323 = sbr.rel (%p321) target = $region44
        $region43: #{tpu_custom_call.1} parent=23 // pred_region
          %p324 = scmp.lt.s32.totalorder %s26, 1
          %s325 = scalar_select %p324, %s26, 1
          %s326 = scalar_lea.vmem %s4, %s325
        $region44: #{tpu_custom_call.1} parent=23 // pred_fallthru
          _
      $region24: #{tpu_custom_call.1} parent=5 // pred_fallthru
        _
      %p327 = scmp.le.s32.totalorder 1, %s19
      %p328 = scmp.lt.s32.totalorder %s19, 5
      %p329 = pnand %p327, %p328
      %p330 = pneg %p329
      // Predicated region
      $region45: #{tpu_custom_call.1} parent=5 // pred_check
        _
      $region46: #{tpu_custom_call.1} parent=5 // pred_check_branch
        %332 = sbr.rel (%p329) target = $region48
      $region47: #{tpu_custom_call.1} parent=5 // pred_region
        %s333 = ssub.s32 %s19, 1
        %s334 = sand.u32 %s102, 1
        %s335 = scalar_lea.sflag [#allocation3], %s334
        %s336 = sand.u32 %s102, 1
        %s337 = smul.addr %s336, 128
        %s338 = scalar_lea.vmem [#allocation2], %s337
        // Predicated region
        $region49: #{tpu_custom_call.1} parent=47 // pred_check
          %p339 = pneg %p115
        $region50: #{tpu_custom_call.1} parent=47 // pred_check_branch
          %341 = sbr.rel (%p339) target = $region52
        $region51: #{tpu_custom_call.1} parent=47 // pred_region
          %342 = dma.done %s335, 2048
        $region52: #{tpu_custom_call.1} parent=47 // pred_fallthru
          _
        %p343 = scmp.lt.s32.totalorder %s28, 1
        %s344 = scalar_select %p343, %s28, 1
        %p345 = scmp.lt.s32.totalorder %s29, 1
        %s346 = scalar_select %p345, %s29, 1
        %s347 = smul.addr %s344, 2
        %s348 = sadd.s32 %s346, %s347
        %s349 = smul.addr %s348, 8
        %s350 = scalar_lea.vmem %s0, %s349
        %p351 = pneg %p59
        %p352 = pneg %p56
        %p353 = scmp.lt.s32.totalorder %s28, 1
        %s354 = scalar_select %p353, %s28, 1
        %p355 = scmp.lt.s32.totalorder %s29, 1
        %s356 = scalar_select %p355, %s29, 1
        %s357 = smul.addr %s354, 2
        %s358 = sadd.s32 %s356, %s357
        %s359 = smul.addr %s358, 8
        %s360 = scalar_lea.vmem %s1, %s359
        %p361 = pneg %p87
        %p362 = pneg %p84
        %s363 = sand.u32 %s102, 1
        %s364 = scalar_lea.sflag [#allocation3], %s363
        %s365 = sand.u32 %s102, 1
        %s366 = smul.addr %s365, 128
        %s367 = scalar_lea.vmem [#allocation2], %s366
        %p368 = pneg %p115
        %p369 = pneg %p112
        %p370 = scmp.lt.s32.totalorder %s28, 1
        %s371 = scalar_select %p370, %s28, 1
        %p372 = scmp.lt.s32.totalorder %s29, 1
        %s373 = scalar_select %p372, %s29, 1
        %s374 = smul.addr %s371, 2
        %s375 = sadd.s32 %s373, %s374
        %s376 = smul.addr %s375, 8
        %s377 = scalar_lea.vmem %s3, %s376
        %p378 = pneg %p143
        %p379 = pneg %p140
        %p380 = scmp.lt.s32.totalorder %s28, 1
        %s381 = scalar_select %p380, %s28, 1
        %s382 = scalar_lea.vmem %s4, %s381
        %p383 = pneg %p169
        %p384 = pneg %p166
        %p385 = pneg %p190
        %p386 = pneg %p187
        %p387 = pneg %p211
        %p388 = pneg %p208
        %p389 = pneg %p239
        %p390 = pneg %p236
        %s391 = sand.u32 %s226, 1
        %s392 = scalar_lea.sflag [#allocation4], %s391
        %s393 = sand.u32 %s226, 1
        %s394 = smul.addr %s393, 8
        %s395 = scalar_lea.vmem [#allocation5], %s394
        %p396 = scmp.lt.s32.totalorder %s28, 1
        %s397 = scalar_select %p396, %s28, 1
        %p398 = scmp.lt.s32.totalorder %s29, 1
        %s399 = scalar_select %p398, %s29, 1
        %s400 = smul.addr %s397, 2
        %s401 = sadd.s32 %s399, %s400
        %s402 = smul.addr %s401, 8
        %s403 = scalar_lea.vmem %s0, %s402
        %p404 = scmp.lt.s32.totalorder %s28, 1
        %s405 = scalar_select %p404, %s28, 1
        %p406 = scmp.lt.s32.totalorder %s29, 1
        %s407 = scalar_select %p406, %s29, 1
        %s408 = smul.addr %s405, 2
        %s409 = sadd.s32 %s407, %s408
        %s410 = smul.addr %s409, 8
        %s411 = scalar_lea.vmem %s1, %s410
        %s412 = smul.u32 8, %s29
        %p413 = scmp.lt.s32.totalorder %s28, 1
        %s414 = scalar_select %p413, %s28, 1
        %p415 = scmp.lt.s32.totalorder %s29, 1
        %s416 = scalar_select %p415, %s29, 1
        %s417 = smul.addr %s414, 2
        %s418 = sadd.s32 %s416, %s417
        %s419 = smul.addr %s418, 8
        %s420 = scalar_lea.vmem %s3, %s419
        %p421 = scmp.lt.s32.totalorder %s28, 1
        %s422 = scalar_select %p421, %s28, 1
        %s423 = scalar_lea.vmem %s4, %s422
        %v424 = vld [vmem:[%s403] sm:$0xff]
        %v425 = vld [vmem:[%s411] sm:$0xff]
        %v426 = vld [vmem:[%s338] sm:$0xff]
        %v427 = vld [vmem:[%s338 + $0x8] sm:$0xff]
        %v428 = vld [vmem:[%s338 + $0x10] sm:$0xff]
        %v429 = vld [vmem:[%s338 + $0x18] sm:$0xff]
        %v430 = vld [vmem:[%s338 + $0x20] sm:$0xff]
        %v431 = vld [vmem:[%s338 + $0x28] sm:$0xff]
        %v432 = vld [vmem:[%s338 + $0x30] sm:$0xff]
        %v433 = vld [vmem:[%s338 + $0x38] sm:$0xff]
        %v434 = vld [vmem:[%s338 + $0x40] sm:$0xff]
        %v435 = vld [vmem:[%s338 + $0x48] sm:$0xff]
        %v436 = vld [vmem:[%s338 + $0x50] sm:$0xff]
        %v437 = vld [vmem:[%s338 + $0x58] sm:$0xff]
        %v438 = vld [vmem:[%s338 + $0x60] sm:$0xff]
        %v439 = vld [vmem:[%s338 + $0x68] sm:$0xff]
        %v440 = vld [vmem:[%s338 + $0x70] sm:$0xff]
        %v441 = vld [vmem:[%s338 + $0x78] sm:$0xff]
        %v442 = vld [vmem:[%s420] sm:$0xff]
        %v443 = vld [vmem:[%s423] sm:$0x1]
        %v445 = vcombine.high %v424, %v424
        %v447 = vunpack.c.l.s4 1966171168
        %v448 = vunpack.c.0.s8 %v447
        %v449 = vlaneseq
        %v450 = vshrl.u32 %v449, 7
        %v451 = vsub.s32 %v448, %v450
        %v452 = vrot.slane %v424, %v451
        %v454 = vunpack.c.l.s4 1966171168
        %v455 = vunpack.c.0.s8 %v454
        %v456 = vlaneseq
        %v457 = vshrl.u32 %v456, 7
        %v458 = vsub.s32 %v455, %v457
        %v459 = vrot.slane %v445, %v458
        %v460 = vcombine.high %v452, %v452
        %v461 = vcombine.high %v459, %v459
        %v463 = vunpack.c.l.s4 1966171168
        %v464 = vunpack.c.0.s8 %v463
        %v465 = vlaneseq
        %v466 = vshrl.u32 %v465, 7
        %v467 = vsub.s32 %v464, %v466
        %v468 = vrot.slane %v452, %v467
        %v470 = vunpack.c.l.s4 1966171168
        %v471 = vunpack.c.0.s8 %v470
        %v472 = vlaneseq
        %v473 = vshrl.u32 %v472, 7
        %v474 = vsub.s32 %v471, %v473
        %v475 = vrot.slane %v459, %v474
        %v477 = vunpack.c.l.s4 1966171168
        %v478 = vunpack.c.0.s8 %v477
        %v479 = vlaneseq
        %v480 = vshrl.u32 %v479, 7
        %v481 = vsub.s32 %v478, %v480
        %v482 = vrot.slane %v460, %v481
        %v484 = vunpack.c.l.s4 1966171168
        %v485 = vunpack.c.0.s8 %v484
        %v486 = vlaneseq
        %v487 = vshrl.u32 %v486, 7
        %v488 = vsub.s32 %v485, %v487
        %v489 = vrot.slane %v461, %v488
        %v490 = vcombine.high %v468, %v468
        %v491 = vcombine.high %v475, %v475
        %v492 = vcombine.high %v482, %v482
        %v493 = vcombine.high %v489, %v489
        %v494 = vlaneseq
        %v495 = vshrl.u32 %v494, 7
        %v496 = vsub.s32 0, %v495
        %v497 = vrot.slane %v468, %v496
        %v498 = vlaneseq
        %v499 = vshrl.u32 %v498, 7
        %v500 = vsub.s32 0, %v499
        %v501 = vrot.slane %v482, %v500
        %v502 = vlaneseq
        %v503 = vshrl.u32 %v502, 7
        %v504 = vsub.s32 0, %v503
        %v505 = vrot.slane %v490, %v504
        %v506 = vlaneseq
        %v507 = vshrl.u32 %v506, 7
        %v508 = vsub.s32 0, %v507
        %v509 = vrot.slane %v492, %v508
        %v510 = vlaneseq
        %v511 = vshrl.u32 %v510, 7
        %v512 = vsub.s32 0, %v511
        %v513 = vrot.slane %v475, %v512
        %v514 = vlaneseq
        %v515 = vshrl.u32 %v514, 7
        %v516 = vsub.s32 0, %v515
        %v517 = vrot.slane %v489, %v516
        %v518 = vlaneseq
        %v519 = vshrl.u32 %v518, 7
        %v520 = vsub.s32 0, %v519
        %v521 = vrot.slane %v491, %v520
        %v522 = vlaneseq
        %v523 = vshrl.u32 %v522, 7
        %v524 = vsub.s32 0, %v523
        %v525 = vrot.slane %v493, %v524
        %v534 = vmul.f32 %v426, %v497
        %v535 = vmul.f32 %v427, %v497
        %v536 = vmul.f32 %v428, %v501
        %v537 = vmul.f32 %v429, %v501
        %v538 = vmul.f32 %v430, %v505
        %v539 = vmul.f32 %v431, %v505
        %v540 = vmul.f32 %v432, %v509
        %v541 = vmul.f32 %v433, %v509
        %v542 = vmul.f32 %v434, %v513
        %v543 = vmul.f32 %v435, %v513
        %v544 = vmul.f32 %v436, %v517
        %v545 = vmul.f32 %v437, %v517
        %v546 = vmul.f32 %v438, %v521
        %v547 = vmul.f32 %v439, %v521
        %v548 = vmul.f32 %v440, %v525
        %v549 = vmul.f32 %v441, %v525
        %vm550 = vcmask 261120
        %v551 = vsel %vm550, %v534, 0.0
        %552 = vadd.xlane.f32.xlu0 %v551
        %v553 = vpop.xlane.xlu0 %552
        %v554 = vsel %vm550, %v535, 0.0
        %555 = vadd.xlane.f32.xlu0 %v554
        %v556 = vpop.xlane.xlu0 %555
        %v557 = vsel %vm550, %v536, 0.0
        %558 = vadd.xlane.f32.xlu0 %v557
        %v559 = vpop.xlane.xlu0 %558
        %v560 = vsel %vm550, %v537, 0.0
        %561 = vadd.xlane.f32.xlu0 %v560
        %v562 = vpop.xlane.xlu0 %561
        %v563 = vsel %vm550, %v538, 0.0
        %564 = vadd.xlane.f32.xlu0 %v563
        %v565 = vpop.xlane.xlu0 %564
        %v566 = vsel %vm550, %v539, 0.0
        %567 = vadd.xlane.f32.xlu0 %v566
        %v568 = vpop.xlane.xlu0 %567
        %v569 = vsel %vm550, %v540, 0.0
        %570 = vadd.xlane.f32.xlu0 %v569
        %v571 = vpop.xlane.xlu0 %570
        %v572 = vsel %vm550, %v541, 0.0
        %573 = vadd.xlane.f32.xlu0 %v572
        %v574 = vpop.xlane.xlu0 %573
        %v575 = vsel %vm550, %v542, 0.0
        %576 = vadd.xlane.f32.xlu0 %v575
        %v577 = vpop.xlane.xlu0 %576
        %v578 = vsel %vm550, %v543, 0.0
        %579 = vadd.xlane.f32.xlu0 %v578
        %v580 = vpop.xlane.xlu0 %579
        %v581 = vsel %vm550, %v544, 0.0
        %582 = vadd.xlane.f32.xlu0 %v581
        %v583 = vpop.xlane.xlu0 %582
        %v584 = vsel %vm550, %v545, 0.0
        %585 = vadd.xlane.f32.xlu0 %v584
        %v586 = vpop.xlane.xlu0 %585
        %v587 = vsel %vm550, %v546, 0.0
        %588 = vadd.xlane.f32.xlu0 %v587
        %v589 = vpop.xlane.xlu0 %588
        %v590 = vsel %vm550, %v547, 0.0
        %591 = vadd.xlane.f32.xlu0 %v590
        %v592 = vpop.xlane.xlu0 %591
        %v593 = vsel %vm550, %v548, 0.0
        %594 = vadd.xlane.f32.xlu0 %v593
        %v595 = vpop.xlane.xlu0 %594
        %v596 = vsel %vm550, %v549, 0.0
        %597 = vadd.xlane.f32.xlu0 %v596
        %v598 = vpop.xlane.xlu0 %597
        %600 = vset.pattern.permute.xlu0 0
        %601 = vperm.xlu0 %600, %v425
        %v602 = vpop.permute.xlu0 %601
        %v603 = vlaneseq
        %v604 = vshrl.u32 %v603, 7
        %v605 = vsub.s32 0, %v604
        %v606 = vrot.slane %v602, %v605
        %v607 = vlaneseq
        %v608 = vshrl.u32 %v607, 7
        %v609 = vsub.s32 1, %v608
        %v610 = vrot.slane %v602, %v609
        %v611 = vlaneseq
        %v612 = vshrl.u32 %v611, 7
        %v613 = vsub.s32 2, %v612
        %v614 = vrot.slane %v602, %v613
        %v615 = vlaneseq
        %v616 = vshrl.u32 %v615, 7
        %v617 = vsub.s32 3, %v616
        %v618 = vrot.slane %v602, %v617
        %v619 = vlaneseq
        %v620 = vshrl.u32 %v619, 7
        %v621 = vsub.s32 4, %v620
        %v622 = vrot.slane %v602, %v621
        %v623 = vlaneseq
        %v624 = vshrl.u32 %v623, 7
        %v625 = vsub.s32 5, %v624
        %v626 = vrot.slane %v602, %v625
        %v627 = vlaneseq
        %v628 = vshrl.u32 %v627, 7
        %v629 = vsub.s32 6, %v628
        %v630 = vrot.slane %v602, %v629
        %v631 = vlaneseq
        %v632 = vshrl.u32 %v631, 7
        %v633 = vsub.s32 7, %v632
        %v634 = vrot.slane %v602, %v633
        %v643 = vadd.f32 %v553, %v606
        %v644 = vadd.f32 %v556, %v606
        %v645 = vadd.f32 %v559, %v610
        %v646 = vadd.f32 %v562, %v610
        %v647 = vadd.f32 %v565, %v614
        %v648 = vadd.f32 %v568, %v614
        %v649 = vadd.f32 %v571, %v618
        %v650 = vadd.f32 %v574, %v618
        %v651 = vadd.f32 %v577, %v622
        %v652 = vadd.f32 %v580, %v622
        %v653 = vadd.f32 %v583, %v626
        %v654 = vadd.f32 %v586, %v626
        %v655 = vadd.f32 %v589, %v630
        %v656 = vadd.f32 %v592, %v630
        %v657 = vadd.f32 %v595, %v634
        %v658 = vadd.f32 %v598, %v634
        %v659 = vmul.f32 %v643, 0.17677669
        %v660 = vmul.f32 %v644, 0.17677669
        %v661 = vmul.f32 %v645, 0.17677669
        %v662 = vmul.f32 %v646, 0.17677669
        %v663 = vmul.f32 %v647, 0.17677669
        %v664 = vmul.f32 %v648, 0.17677669
        %v665 = vmul.f32 %v649, 0.17677669
        %v666 = vmul.f32 %v650, 0.17677669
        %v667 = vmul.f32 %v651, 0.17677669
        %v668 = vmul.f32 %v652, 0.17677669
        %v669 = vmul.f32 %v653, 0.17677669
        %v670 = vmul.f32 %v654, 0.17677669
        %v671 = vmul.f32 %v655, 0.17677669
        %v672 = vmul.f32 %v656, 0.17677669
        %v673 = vmul.f32 %v657, 0.17677669
        %v674 = vmul.f32 %v658, 0.17677669
        %vm675 = vcmp.ne.f32.partialorder %v443, 0.0
        %v676 = vsel %vm675, 1, 0
        %v677 = vlaneseq
        %v678 = vshrl.u32 %v677, 7
        %v679 = vsub.s32 0, %v678
        %v680 = vrot.slane %v676, %v679
        %vm681 = vcmp.eq.s32.totalorder %v680, 1
        %698 = vset.pattern.permute.xlu0 0
        %699 = vperm.xlu0 %698, %v659
        %v700 = vpop.permute.xlu0 %699
        %701 = vset.pattern.permute.xlu0 0
        %702 = vperm.xlu0 %701, %v660
        %v703 = vpop.permute.xlu0 %702
        %704 = vset.pattern.permute.xlu0 0
        %705 = vperm.xlu0 %704, %v661
        %v706 = vpop.permute.xlu0 %705
        %707 = vset.pattern.permute.xlu0 0
        %708 = vperm.xlu0 %707, %v662
        %v709 = vpop.permute.xlu0 %708
        %710 = vset.pattern.permute.xlu0 0
        %711 = vperm.xlu0 %710, %v663
        %v712 = vpop.permute.xlu0 %711
        %713 = vset.pattern.permute.xlu0 0
        %714 = vperm.xlu0 %713, %v664
        %v715 = vpop.permute.xlu0 %714
        %716 = vset.pattern.permute.xlu0 0
        %717 = vperm.xlu0 %716, %v665
        %v718 = vpop.permute.xlu0 %717
        %719 = vset.pattern.permute.xlu0 0
        %720 = vperm.xlu0 %719, %v666
        %v721 = vpop.permute.xlu0 %720
        %722 = vset.pattern.permute.xlu0 0
        %723 = vperm.xlu0 %722, %v667
        %v724 = vpop.permute.xlu0 %723
        %725 = vset.pattern.permute.xlu0 0
        %726 = vperm.xlu0 %725, %v668
        %v727 = vpop.permute.xlu0 %726
        %728 = vset.pattern.permute.xlu0 0
        %729 = vperm.xlu0 %728, %v669
        %v730 = vpop.permute.xlu0 %729
        %731 = vset.pattern.permute.xlu0 0
        %732 = vperm.xlu0 %731, %v670
        %v733 = vpop.permute.xlu0 %732
        %734 = vset.pattern.permute.xlu0 0
        %735 = vperm.xlu0 %734, %v671
        %v736 = vpop.permute.xlu0 %735
        %737 = vset.pattern.permute.xlu0 0
        %738 = vperm.xlu0 %737, %v672
        %v739 = vpop.permute.xlu0 %738
        %740 = vset.pattern.permute.xlu0 0
        %741 = vperm.xlu0 %740, %v673
        %v742 = vpop.permute.xlu0 %741
        %743 = vset.pattern.permute.xlu0 0
        %744 = vperm.xlu0 %743, %v674
        %v745 = vpop.permute.xlu0 %744
        %v746 = vlaneseq
        %v747 = vand.u32 %v746, 127
        %v748 = vlaneseq
        %v749 = vshrl.u32 %v748, 7
        %v750 = vsub.s32 %v747, %v749
        %v751 = vrot.slane %v700, %v750
        %v752 = vadd.s32 %v747, 4294967288
        %v753 = vlaneseq
        %v754 = vshrl.u32 %v753, 7
        %v755 = vsub.s32 %v752, %v754
        %v756 = vrot.slane %v703, %v755
        %vm757 = vcmask 130112
        %v758 = vsel %vm757, %v756, %v751
        %v759 = vlaneseq
        %v760 = vshrl.u32 %v759, 7
        %v761 = vsub.s32 %v747, %v760
        %v762 = vrot.slane %v706, %v761
        %v763 = vlaneseq
        %v764 = vshrl.u32 %v763, 7
        %v765 = vsub.s32 %v752, %v764
        %v766 = vrot.slane %v709, %v765
        %v767 = vsel %vm757, %v766, %v762
        %v768 = vlaneseq
        %v769 = vshrl.u32 %v768, 7
        %v770 = vsub.s32 %v747, %v769
        %v771 = vrot.slane %v712, %v770
        %v772 = vlaneseq
        %v773 = vshrl.u32 %v772, 7
        %v774 = vsub.s32 %v752, %v773
        %v775 = vrot.slane %v715, %v774
        %v776 = vsel %vm757, %v775, %v771
        %v777 = vlaneseq
        %v778 = vshrl.u32 %v777, 7
        %v779 = vsub.s32 %v747, %v778
        %v780 = vrot.slane %v718, %v779
        %v781 = vlaneseq
        %v782 = vshrl.u32 %v781, 7
        %v783 = vsub.s32 %v752, %v782
        %v784 = vrot.slane %v721, %v783
        %v785 = vsel %vm757, %v784, %v780
        %v786 = vlaneseq
        %v787 = vshrl.u32 %v786, 7
        %v788 = vsub.s32 %v747, %v787
        %v789 = vrot.slane %v724, %v788
        %v790 = vlaneseq
        %v791 = vshrl.u32 %v790, 7
        %v792 = vsub.s32 %v752, %v791
        %v793 = vrot.slane %v727, %v792
        %v794 = vsel %vm757, %v793, %v789
        %v795 = vlaneseq
        %v796 = vshrl.u32 %v795, 7
        %v797 = vsub.s32 %v747, %v796
        %v798 = vrot.slane %v730, %v797
        %v799 = vlaneseq
        %v800 = vshrl.u32 %v799, 7
        %v801 = vsub.s32 %v752, %v800
        %v802 = vrot.slane %v733, %v801
        %v803 = vsel %vm757, %v802, %v798
        %v804 = vlaneseq
        %v805 = vshrl.u32 %v804, 7
        %v806 = vsub.s32 %v747, %v805
        %v807 = vrot.slane %v736, %v806
        %v808 = vlaneseq
        %v809 = vshrl.u32 %v808, 7
        %v810 = vsub.s32 %v752, %v809
        %v811 = vrot.slane %v739, %v810
        %v812 = vsel %vm757, %v811, %v807
        %v813 = vlaneseq
        %v814 = vshrl.u32 %v813, 7
        %v815 = vsub.s32 %v747, %v814
        %v816 = vrot.slane %v742, %v815
        %v817 = vlaneseq
        %v818 = vshrl.u32 %v817, 7
        %v819 = vsub.s32 %v752, %v818
        %v820 = vrot.slane %v745, %v819
        %v821 = vsel %vm757, %v820, %v816
        %vm822 = vcmask 1041409
        %v823 = vsel %vm822, %v767, %v758
        %vm824 = vcmask 1042434
        %v825 = vsel %vm824, %v776, %v823
        %vm826 = vcmask 1043459
        %v827 = vsel %vm826, %v785, %v825
        %vm828 = vcmask 1044484
        %v829 = vsel %vm828, %v794, %v827
        %vm830 = vcmask 1045509
        %v831 = vsel %vm830, %v803, %v829
        %vm832 = vcmask 1046534
        %v833 = vsel %vm832, %v812, %v831
        %vm834 = vcmask 1047559
        %v835 = vsel %vm834, %v821, %v833
        %v837 = vsel %vm681, %v835, -1e+09
        %vm838 = vcmask 130048
        %v839 = vsel %vm838, %v837, -inf
        %840 = vmax.xlane.f32.xlu0 %v839
        %v841 = vpop.xlane.xlu0 %840
        %v842 = vsub.f32 %v837, %v841
        %v843 = vmul.f32 %v842, 1.442695
        %v844 = vpow.pop %v843
        %v845 = vsel %vm838, %v844, 0.0
        %846 = vadd.xlane.f32.xlu0 %v845
        %v847 = vpop.xlane.xlu0 %846
        %v848 = vrcp.pop %v847
        %v849 = vmul.f32 %v844, %v848
        %v850 = vlaneseq
        %v851 = vshrl.u32 %v850, 7
        %v852 = vsub.s32 0, %v851
        %v853 = vrot.slane %v849, %v852
        %855 = vbcast.lane.b32.xlu0 %v853, 256
        %v856 = vpop.permute.xlu0 %855
        %s858 = sor.u32 256, 8
        %859 = vbcast.lane.b32.xlu0 %v853, %s858
        %v860 = vpop.permute.xlu0 %859
        %v861 = vlaneseq
        %v862 = vshrl.u32 %v861, 7
        %v863 = vsub.s32 1, %v862
        %v864 = vrot.slane %v849, %v863
        %866 = vbcast.lane.b32.xlu0 %v864, 256
        %v867 = vpop.permute.xlu0 %866
        %s869 = sor.u32 256, 8
        %870 = vbcast.lane.b32.xlu0 %v864, %s869
        %v871 = vpop.permute.xlu0 %870
        %v872 = vlaneseq
        %v873 = vshrl.u32 %v872, 7
        %v874 = vsub.s32 2, %v873
        %v875 = vrot.slane %v849, %v874
        %877 = vbcast.lane.b32.xlu0 %v875, 256
        %v878 = vpop.permute.xlu0 %877
        %s880 = sor.u32 256, 8
        %881 = vbcast.lane.b32.xlu0 %v875, %s880
        %v882 = vpop.permute.xlu0 %881
        %v883 = vlaneseq
        %v884 = vshrl.u32 %v883, 7
        %v885 = vsub.s32 3, %v884
        %v886 = vrot.slane %v849, %v885
        %888 = vbcast.lane.b32.xlu0 %v886, 256
        %v889 = vpop.permute.xlu0 %888
        %s891 = sor.u32 256, 8
        %892 = vbcast.lane.b32.xlu0 %v886, %s891
        %v893 = vpop.permute.xlu0 %892
        %v894 = vlaneseq
        %v895 = vshrl.u32 %v894, 7
        %v896 = vsub.s32 4, %v895
        %v897 = vrot.slane %v849, %v896
        %899 = vbcast.lane.b32.xlu0 %v897, 256
        %v900 = vpop.permute.xlu0 %899
        %s902 = sor.u32 256, 8
        %903 = vbcast.lane.b32.xlu0 %v897, %s902
        %v904 = vpop.permute.xlu0 %903
        %v905 = vlaneseq
        %v906 = vshrl.u32 %v905, 7
        %v907 = vsub.s32 5, %v906
        %v908 = vrot.slane %v849, %v907
        %910 = vbcast.lane.b32.xlu0 %v908, 256
        %v911 = vpop.permute.xlu0 %910
        %s913 = sor.u32 256, 8
        %914 = vbcast.lane.b32.xlu0 %v908, %s913
        %v915 = vpop.permute.xlu0 %914
        %v916 = vlaneseq
        %v917 = vshrl.u32 %v916, 7
        %v918 = vsub.s32 6, %v917
        %v919 = vrot.slane %v849, %v918
        %921 = vbcast.lane.b32.xlu0 %v919, 256
        %v922 = vpop.permute.xlu0 %921
        %s924 = sor.u32 256, 8
        %925 = vbcast.lane.b32.xlu0 %v919, %s924
        %v926 = vpop.permute.xlu0 %925
        %v927 = vlaneseq
        %v928 = vshrl.u32 %v927, 7
        %v929 = vsub.s32 7, %v928
        %v930 = vrot.slane %v849, %v929
        %932 = vbcast.lane.b32.xlu0 %v930, 256
        %v933 = vpop.permute.xlu0 %932
        %s935 = sor.u32 256, 8
        %936 = vbcast.lane.b32.xlu0 %v930, %s935
        %v937 = vpop.permute.xlu0 %936
        %v938 = vmul.f32 %v856, %v426
        %v939 = vmul.f32 %v860, %v427
        %v940 = vmul.f32 %v867, %v428
        %v941 = vmul.f32 %v871, %v429
        %v942 = vmul.f32 %v878, %v430
        %v943 = vmul.f32 %v882, %v431
        %v944 = vmul.f32 %v889, %v432
        %v945 = vmul.f32 %v893, %v433
        %v946 = vmul.f32 %v900, %v434
        %v947 = vmul.f32 %v904, %v435
        %v948 = vmul.f32 %v911, %v436
        %v949 = vmul.f32 %v915, %v437
        %v950 = vmul.f32 %v922, %v438
        %v951 = vmul.f32 %v926, %v439
        %v952 = vmul.f32 %v933, %v440
        %v953 = vmul.f32 %v937, %v441
        %v954 = vsel %vm550, %v938, 0.0
        %v955 = vsel %vm550, %v939, 0.0
        %v956 = vadd.f32 %v954, %v955
        %v957 = vrot.slane %v956, 4
        %v958 = vadd.f32 %v956, %v957
        %v959 = vrot.slane %v958, 2
        %v960 = vadd.f32 %v958, %v959
        %v961 = vrot.slane %v960, 1
        %v962 = vadd.f32 %v960, %v961
        %v963 = vsel %vm550, %v940, 0.0
        %v964 = vsel %vm550, %v941, 0.0
        %v965 = vadd.f32 %v963, %v964
        %v966 = vrot.slane %v965, 4
        %v967 = vadd.f32 %v965, %v966
        %v968 = vrot.slane %v967, 2
        %v969 = vadd.f32 %v967, %v968
        %v970 = vrot.slane %v969, 1
        %v971 = vadd.f32 %v969, %v970
        %v972 = vsel %vm550, %v942, 0.0
        %v973 = vsel %vm550, %v943, 0.0
        %v974 = vadd.f32 %v972, %v973
        %v975 = vrot.slane %v974, 4
        %v976 = vadd.f32 %v974, %v975
        %v977 = vrot.slane %v976, 2
        %v978 = vadd.f32 %v976, %v977
        %v979 = vrot.slane %v978, 1
        %v980 = vadd.f32 %v978, %v979
        %v981 = vsel %vm550, %v944, 0.0
        %v982 = vsel %vm550, %v945, 0.0
        %v983 = vadd.f32 %v981, %v982
        %v984 = vrot.slane %v983, 4
        %v985 = vadd.f32 %v983, %v984
        %v986 = vrot.slane %v985, 2
        %v987 = vadd.f32 %v985, %v986
        %v988 = vrot.slane %v987, 1
        %v989 = vadd.f32 %v987, %v988
        %v990 = vsel %vm550, %v946, 0.0
        %v991 = vsel %vm550, %v947, 0.0
        %v992 = vadd.f32 %v990, %v991
        %v993 = vrot.slane %v992, 4
        %v994 = vadd.f32 %v992, %v993
        %v995 = vrot.slane %v994, 2
        %v996 = vadd.f32 %v994, %v995
        %v997 = vrot.slane %v996, 1
        %v998 = vadd.f32 %v996, %v997
        %v999 = vsel %vm550, %v948, 0.0
        %v1000 = vsel %vm550, %v949, 0.0
        %v1001 = vadd.f32 %v999, %v1000
        %v1002 = vrot.slane %v1001, 4
        %v1003 = vadd.f32 %v1001, %v1002
        %v1004 = vrot.slane %v1003, 2
        %v1005 = vadd.f32 %v1003, %v1004
        %v1006 = vrot.slane %v1005, 1
        %v1007 = vadd.f32 %v1005, %v1006
        %v1008 = vsel %vm550, %v950, 0.0
        %v1009 = vsel %vm550, %v951, 0.0
        %v1010 = vadd.f32 %v1008, %v1009
        %v1011 = vrot.slane %v1010, 4
        %v1012 = vadd.f32 %v1010, %v1011
        %v1013 = vrot.slane %v1012, 2
        %v1014 = vadd.f32 %v1012, %v1013
        %v1015 = vrot.slane %v1014, 1
        %v1016 = vadd.f32 %v1014, %v1015
        %v1017 = vsel %vm550, %v952, 0.0
        %v1018 = vsel %vm550, %v953, 0.0
        %v1019 = vadd.f32 %v1017, %v1018
        %v1020 = vrot.slane %v1019, 4
        %v1021 = vadd.f32 %v1019, %v1020
        %v1022 = vrot.slane %v1021, 2
        %v1023 = vadd.f32 %v1021, %v1022
        %v1024 = vrot.slane %v1023, 1
        %v1025 = vadd.f32 %v1023, %v1024
        %v1026 = vld [vmem:[%s5] sm:$0xff]
        %v1027 = vld [vmem:[%s5 + $0x8] sm:$0xff]
        %v1028 = vld [vmem:[%s5 + $0x10] sm:$0xff]
        %v1029 = vld [vmem:[%s5 + $0x18] sm:$0xff]
        %v1030 = vld [vmem:[%s6] sm:$0x1]
        %v1032 = vlaneseq
        %v1033 = vshrl.u32 %v1032, 7
        %v1034 = vsub.s32 0, %v1033
        %v1035 = vrot.slane %v1030, %v1034
        %v1045 = vsel %vm822, %v971, %v962
        %v1046 = vsel %vm824, %v980, %v1045
        %v1047 = vsel %vm826, %v989, %v1046
        %v1048 = vsel %vm828, %v998, %v1047
        %v1049 = vsel %vm830, %v1007, %v1048
        %v1050 = vsel %vm832, %v1016, %v1049
        %v1051 = vsel %vm834, %v1025, %v1050
        %v1052 = vsel %vm550, %v1051, 0
        %1054 = vmatprep.subr.mxu0 0.0
        %1055 = vmatpush1.msra.mxu0 0.0
        %1056 = vmatprep.subr.mxu0 0.0
        %1057 = vmatpush1.msra.mxu0 0.0
        %1058 = vmatprep.subr.mxu0 0.0
        %1059 = vmatpush1.msra.mxu0 0.0
        %1060 = vmatprep.subr.mxu0 0.0
        %1061 = vmatpush1.msra.mxu0 0.0
        %1062 = vmatprep.subr.mxu0 0.0
        %1063 = vmatpush1.msra.mxu0 0.0
        %1064 = vmatprep.subr.mxu0 0.0
        %1065 = vmatpush1.msra.mxu0 0.0
        %1066 = vmatprep.subr.mxu0 0.0
        %1067 = vmatpush1.msra.mxu0 0.0
        %1068 = vmatprep.subr.mxu0 0.0
        %1069 = vmatpush1.msra.mxu0 0.0
        %1070 = vmatprep.subr.mxu0 0.0
        %1071 = vmatpush1.msra.mxu0 0.0
        %1072 = vmatprep.subr.mxu0 0.0
        %1073 = vmatpush1.msra.mxu0 0.0
        %1074 = vmatprep.subr.mxu0 0.0
        %1075 = vmatpush1.msra.mxu0 0.0
        %1076 = vmatprep.subr.mxu0 0.0
        %1077 = vmatpush1.msra.mxu0 0.0
        %1078 = vmatprep.subr.mxu0 0.0
        %1079 = vmatpush1.msra.mxu0 %v1029
        %1080 = vmatprep.subr.mxu0 0.0
        %1081 = vmatpush1.msra.mxu0 %v1028
        %1082 = vmatprep.subr.mxu0 0.0
        %1083 = vmatpush1.msra.mxu0 %v1027
        %1084 = vmatprep.subr.mxu0 0.0
        %1085 = vmatpush1.msra.mxu0 %v1026
        %1086 = vmatprep.subr.mxu0 0.0
        %1087 = vmatpush2.msra.mxu0 0.0
        %1088 = vmatprep.subr.mxu0 0.0
        %1089 = vmatpush2.msra.mxu0 0.0
        %1090 = vmatprep.subr.mxu0 0.0
        %1091 = vmatpush2.msra.mxu0 0.0
        %1092 = vmatprep.subr.mxu0 0.0
        %1093 = vmatpush2.msra.mxu0 0.0
        %1094 = vmatprep.subr.mxu0 0.0
        %1095 = vmatpush2.msra.mxu0 0.0
        %1096 = vmatprep.subr.mxu0 0.0
        %1097 = vmatpush2.msra.mxu0 0.0
        %1098 = vmatprep.subr.mxu0 0.0
        %1099 = vmatpush2.msra.mxu0 0.0
        %1100 = vmatprep.subr.mxu0 0.0
        %1101 = vmatpush2.msra.mxu0 0.0
        %1102 = vmatprep.subr.mxu0 0.0
        %1103 = vmatpush2.msra.mxu0 0.0
        %1104 = vmatprep.subr.mxu0 0.0
        %1105 = vmatpush2.msra.mxu0 0.0
        %1106 = vmatprep.subr.mxu0 0.0
        %1107 = vmatpush2.msra.mxu0 0.0
        %1108 = vmatprep.subr.mxu0 0.0
        %1109 = vmatpush2.msra.mxu0 0.0
        %1110 = vmatprep.subr.mxu0 0.0
        %1111 = vmatpush2.msra.mxu0 0.0
        %1112 = vmatprep.subr.mxu0 0.0
        %1113 = vmatpush2.msra.mxu0 0.0
        %1114 = vmatprep.subr.mxu0 0.0
        %1115 = vmatpush2.msra.mxu0 0.0
        %1116 = vmatprep.subr.mxu0 0.0
        %1117 = vmatpush2.msra.mxu0 0.0
        %1118 = vmatprep.mubr.f32.mxu0 0.0
        %1119 = vmatmul.mubr.f32.gmra.mxu0 %v1052
        %v1120 = vpop.f32.mrf.mxu0
        %v1121 = vadd.f32 %v1035, %v1120
        %v1122 = vpop.f32.mrf.mxu0
        %1123 = vdwg.mxu0
        %1125 = vset.pattern.permute.xlu0 0
        %1126 = vperm.xlu0 %1125, %v442
        %v1127 = vpop.permute.xlu0 %1126
        %v1129 = vmul.f32 %v1121, %v1127
        %1130 = vst.msk [vmem:[%s395] sm:$0xff] %vm550, %v1129
        %s1131 = sand.u32 %s226, 1
        %s1132 = scalar_lea.sflag [#allocation4], %s1131
        %s1133 = sand.u32 %s226, 1
        %s1134 = smul.addr %s1133, 8
        %s1135 = scalar_lea.vmem [#allocation5], %s1134
        // Predicated region
        $region53: #{tpu_custom_call.1} parent=47 // pred_check
          %p1136 = pneg %p236
        $region54: #{tpu_custom_call.1} parent=47 // pred_check_branch
          %1138 = sbr.rel (%p1136) target = $region56
        $region55: #{tpu_custom_call.1} parent=47 // pred_region
          %s1140 = ssub.s32 128, 128
          %1141 = vsyncadd %s1132, %s1140
          %s1142 = smul.addr %s28, 2
          %s1143 = sadd.s32 %s29, %s1142
          %s1144 = smul.addr %s1143, 128
          %s1145 = scalar_lea.hbm %s7, %s1144
          %s1147 = sshll.u32 %s1135, 4
          %s1148 = int_to_ptr.vmem [resolvable:$true] %s1147
          %1150 = dma.vmem_to_hbm [thread:$0]  %s1148, 128, %s1145, %s1132
        $region56: #{tpu_custom_call.1} parent=47 // pred_fallthru
          _
      $region48: #{tpu_custom_call.1} parent=5 // pred_fallthru
        _
      %p1151 = scmp.le.s32.totalorder 2, %s19
      // Predicated region
      $region57: #{tpu_custom_call.1} parent=5 // pred_check
        %p1152 = pneg %p1151
      $region58: #{tpu_custom_call.1} parent=5 // pred_check_branch
        %1154 = sbr.rel (%p1152) target = $region60
      $region59: #{tpu_custom_call.1} parent=5 // pred_region
        %s1155 = ssub.s32 %s19, 2
        // Predicated region
        $region61: #{tpu_custom_call.1} parent=59 // pred_check
          %p1156 = pneg %p242
        $region62: #{tpu_custom_call.1} parent=59 // pred_check_branch
          %1158 = sbr.rel (%p1156) target = $region64
        $region63: #{tpu_custom_call.1} parent=59 // pred_region
          %s1159 = sand.u32 %s227, 1
          %s1160 = scalar_lea.sflag [#allocation4], %s1159
          %s1161 = sand.u32 %s227, 1
          %s1162 = smul.addr %s1161, 8
          %s1163 = scalar_lea.vmem [#allocation5], %s1162
          %1164 = dma.done %s1160, 128
        $region64: #{tpu_custom_call.1} parent=59 // pred_fallthru
          _
      $region60: #{tpu_custom_call.1} parent=5 // pred_fallthru
        _
    $region6: #{tpu_custom_call.1} parent=1 // loop_footer
      %s23 = sadd.s32 1, %s19
    $region7: #{tpu_custom_call.1} parent=1 // loop_footer_branch
      %18 = sbr.rel target = $region3
    $region8: #{tpu_custom_call.1} parent=1 // loop_exit
      _
    %1165 = vsyncpa [#allocation3], 1
    %s1166 = scalar_lea.sflag [#allocation3], 1
    %1167 = vsyncpa %s1166, 1
    %1168 = vsyncpa [#allocation4], 1
    %s1169 = scalar_lea.sflag [#allocation4], 1
    %1170 = vsyncpa %s1169, 1

</llo_original>
